<compile_context>
chip_gen: v7x
topology: tpu7x:2x2x1
jax: 0.10.0
libtpu: 0.0.40
codegen_flags: <defaults>
</compile_context>

<pallas_src>
import functools

import jax
import jax.numpy as jnp
from jax import lax
from jax.experimental import pallas as pl
from jax.experimental.pallas import tpu as pltpu  # noqa: F401  (TPU backend / memory spaces)

# ---------------- config (small synthetic sizes) ----------------
VOCAB = 64
HIDDEN = 32
MAX_POS = 16
COLUMNS = 2
NUM_LAYERS = 4          # 2 layers per column
BATCH = 2
SEQ = 8


# ---------------- fused forward kernel ----------------
def _onehot(ids_col, num, dtype):
    # ids_col: [N,1] int32 -> [N,num] one-hot (built in-register, never touches HBM)
    cols = lax.broadcasted_iota(jnp.int32, (ids_col.shape[0], num), 1)
    return jnp.where(ids_col == cols, 1.0, 0.0).astype(dtype)


def _fused_forward_kernel(*refs, has_mask, has_labels):
    it = iter(refs)
    tok_ids = next(it)[...]                                   # [N,1] int32
    pos_ids = next(it)[...]                                   # [N,1] int32
    mask_ids = next(it)[...] if has_mask else None            # [N,1] int32
    labels = next(it)[...] if has_labels else None            # [N,1] int32
    tok_e = next(it)[...]                                     # [V,H]  bf16
    pos_e = next(it)[...]                                     # [P,H]  bf16
    msk_e = next(it)[...] if has_mask else None               # [2,H]  f32
    w_first = next(it)[...]                                   # [H,2H] bf16  = [W0|W2]
    b_first = next(it)[...]                                   # [1,2H] f32   = [b0|b2]
    w_second = next(it)[...]                                  # [2H,2H] bf16 block-diag(W1,W3)
    b_second = next(it)[...]                                  # [1,2H] f32   = [b1|b3]
    w_out = next(it)[...]                                     # [2H,V] bf16
    b_out = next(it)[...]                                     # [1,V]  f32
    logits_ref = next(it)                                     # [N,V]  f32 out
    loss_ref = next(it) if has_labels else None               # [1,1]  f32 out

    n = tok_ids.shape[0]
    vocab = tok_e.shape[0]
    max_pos = pos_e.shape[0]

    # --- embeddings: gather via in-register one-hot + bf16 MXU dots (f32 acc) ---
    x = jnp.dot(_onehot(tok_ids, vocab, jnp.bfloat16), tok_e,
                preferred_element_type=jnp.float32)
    x = x + jnp.dot(_onehot(pos_ids, max_pos, jnp.bfloat16), pos_e,
                    preferred_element_type=jnp.float32)
    if has_mask:
        # 2-row embedding lookup == lerp between the two rows (pure VPU, no MXU)
        m0 = msk_e[0:1, :]
        m1 = msk_e[1:2, :]
        x = x + m0 + mask_ids.astype(jnp.float32) * (m1 - m0)

    # --- column-fused layer stack (stand-in TransformerLayer = Linear + GELU) ---
    h = jnp.dot(x.astype(jnp.bfloat16), w_first,
                preferred_element_type=jnp.float32) + b_first        # [N,2H]
    h = jax.nn.gelu(h)   # f32 epilogue (v5e-safe)
    h = jnp.dot(h.astype(jnp.bfloat16), w_second,
                preferred_element_type=jnp.float32) + b_second       # [N,2H]
    h = jax.nn.gelu(h)   # h == torch.cat([col0_out, col1_out], dim=-1)

    logits = jnp.dot(h.astype(jnp.bfloat16), w_out,
                     preferred_element_type=jnp.float32) + b_out     # [N,V]
    logits_ref[...] = logits

    if has_labels:
        # fused CrossEntropyLoss: mean over valid targets, ignore_index=-100 semantics
        m = jnp.max(logits, axis=-1, keepdims=True)
        lse = m + jnp.log(jnp.sum(jnp.exp(logits - m), axis=-1, keepdims=True))
        tgt = jnp.sum(_onehot(labels, vocab, jnp.float32) * logits,
                      axis=-1, keepdims=True)
        valid = (labels >= 0).astype(jnp.float32)                    # [N,1]
        denom = jnp.maximum(jnp.sum(valid), 1.0)
        loss_ref[0, 0] = jnp.sum((lse - tgt) * valid) / denom


# ---------------- pallas_call helper ----------------
def _vspec(shape):
    # whole-array block in VMEM, grid = ()
    return pl.BlockSpec(shape, lambda s=shape: (0,) * len(s))


# ---------------- parameter init (deterministic, same layout as before) ----------------
def init_params(key):
    n_keys = 3 + 2 * NUM_LAYERS + 2
    ks = jax.random.split(key, n_keys)
    it = iter(ks)
    p = {}
    p["tok_emb"] = 0.02 * jax.random.normal(next(it), (VOCAB, HIDDEN), jnp.float32)
    p["pos_emb"] = 0.02 * jax.random.normal(next(it), (MAX_POS, HIDDEN), jnp.float32)
    p["msk_emb"] = 0.02 * jax.random.normal(next(it), (2, HIDDEN), jnp.float32)
    layers = []
    for _ in range(NUM_LAYERS):
        w = 0.02 * jax.random.normal(next(it), (HIDDEN, HIDDEN), jnp.float32)
        b = 0.02 * jax.random.normal(next(it), (1, HIDDEN), jnp.float32)
        layers.append((w, b))
    p["layers"] = layers
    p["out_w"] = 0.02 * jax.random.normal(next(it), (HIDDEN * COLUMNS, VOCAB), jnp.float32)
    p["out_b"] = 0.02 * jax.random.normal(next(it), (1, VOCAB), jnp.float32)
    return p


def prepare_params(params):
    """One-time fusion of the column weights + bf16 casts for MXU operands."""
    H = HIDDEN
    (w0, b0), (w1, b1), (w2, b2), (w3, b3) = params["layers"]
    # routing: per_col = NUM_LAYERS // COLUMNS = 2  ->  column0 = layers 0,1 ; column1 = layers 2,3
    w_first = jnp.concatenate([w0, w2], axis=1)                       # [H, 2H]
    b_first = jnp.concatenate([b0, b2], axis=1)                       # [1, 2H]
    w_second = jnp.zeros((2 * H, 2 * H), jnp.float32)
    w_second = w_second.at[:H, :H].set(w1).at[H:, H:].set(w3)         # block-diag
    b_second = jnp.concatenate([b1, b3], axis=1)                      # [1, 2H]
    return {
        "tok_e": params["tok_emb"].astype(jnp.bfloat16),
        "pos_e": params["pos_emb"].astype(jnp.bfloat16),
        "msk_e": params["msk_emb"],                                   # f32 (VPU path)
        "w_first": w_first.astype(jnp.bfloat16),
        "b_first": b_first,
        "w_second": w_second.astype(jnp.bfloat16),
        "b_second": b_second,
        "w_out": params["out_w"].astype(jnp.bfloat16),
        "b_out": params["out_b"],
    }


# ---------------- forward pass (single fused pallas_call) ----------------
def model_for_masked_lm_forward(prep, input_ids, mask=None, labels=None):
    B, S = input_ids.shape
    N = B * S
    has_mask = mask is not None
    has_labels = labels is not None

    tok_ids = input_ids.reshape(N, 1).astype(jnp.int32)
    pos_ids = jnp.broadcast_to(
        jnp.arange(S, dtype=jnp.int32), (B, S)).reshape(N, 1)

    inputs = [tok_ids, pos_ids]
    if has_mask:
        inputs.append(mask.reshape(N, 1).astype(jnp.int32))
    if has_labels:
        inputs.append(labels.reshape(N, 1).astype(jnp.int32))
    inputs += [prep["tok_e"], prep["pos_e"]]
    if has_mask:
        inputs.append(prep["msk_e"])
    inputs += [prep["w_first"], prep["b_first"],
               prep["w_second"], prep["b_second"],
               prep["w_out"], prep["b_out"]]

    out_shapes = [jax.ShapeDtypeStruct((N, VOCAB), jnp.float32)]
    if has_labels:
        out_shapes.append(jax.ShapeDtypeStruct((1, 1), jnp.float32))

    kernel = functools.partial(_fused_forward_kernel,
                               has_mask=has_mask, has_labels=has_labels)

    outs = pl.pallas_call(
        kernel,
        out_shape=tuple(out_shapes),
        in_specs=[_vspec(a.shape) for a in inputs],
        out_specs=tuple(_vspec(s.shape) for s in out_shapes),
    )(*inputs)

    logits = outs[0].reshape(B, S, VOCAB)
    if has_labels:
        loss = outs[1][0, 0]
        return loss, logits
    return logits


# ---------------- main ----------------
if __name__ == "__main__":
    key = jax.random.PRNGKey(0)
    k_param, k_ids, k_mask, k_labels = jax.random.split(key, 4)

    params = init_params(k_param)
    prep = prepare_params(params)

    input_ids = jax.random.randint(k_ids, (BATCH, SEQ), 0, VOCAB, dtype=jnp.int32)
    mask = jax.random.randint(k_mask, (BATCH, SEQ), 0, 2, dtype=jnp.int32)
    labels = jax.random.randint(k_labels, (BATCH, SEQ), 0, VOCAB, dtype=jnp.int32)

    fwd = jax.jit(functools.partial(model_for_masked_lm_forward, prep))

    logits_nomask = fwd(input_ids)                       # no mask, no labels
    logits = fwd(input_ids, mask)                        # mask, no labels -> logits only
    loss, logits2 = fwd(input_ids, mask, labels)         # with labels -> (loss, logits)

    jax.block_until_ready((logits_nomask, logits, loss, logits2))
    assert logits_nomask.shape == (BATCH, SEQ, VOCAB)
    assert logits.shape == (BATCH, SEQ, VOCAB)
    assert logits2.shape == (BATCH, SEQ, VOCAB)
    assert loss.shape == ()
    assert bool(jnp.isfinite(loss))
    assert bool(jnp.all(jnp.isfinite(logits2)))
    print("KERNEL_OK")
</pallas_src>

<mosaic_0001>
module attributes {stable_mosaic.version = 11 : i64} {
  func.func @_fused_forward_kernel(%arg0: memref<16x1xi32, #tpu.memory_space<vmem>>, %arg1: memref<16x1xi32, #tpu.memory_space<vmem>>, %arg2: memref<64x32xbf16, #tpu.memory_space<vmem>>, %arg3: memref<16x32xbf16, #tpu.memory_space<vmem>>, %arg4: memref<32x64xbf16, #tpu.memory_space<vmem>>, %arg5: memref<1x64xf32, #tpu.memory_space<vmem>>, %arg6: memref<64x64xbf16, #tpu.memory_space<vmem>>, %arg7: memref<1x64xf32, #tpu.memory_space<vmem>>, %arg8: memref<64x64xbf16, #tpu.memory_space<vmem>>, %arg9: memref<1x64xf32, #tpu.memory_space<vmem>>, %arg10: memref<16x64xf32, #tpu.memory_space<vmem>>) attributes {dimension_semantics = [], scalar_prefetch = 0 : i64, scratch_operands = 0 : i64, tpu.core_type = #tpu.core_type<tc>} {
    %c0 = arith.constant 0 : index
    %c0_0 = arith.constant 0 : index
    %0 = vector.load %arg0[%c0, %c0_0] : memref<16x1xi32, #tpu.memory_space<vmem>>, vector<16x1xi32>
    %c0_1 = arith.constant 0 : index
    %c0_2 = arith.constant 0 : index
    %1 = vector.load %arg1[%c0_1, %c0_2] : memref<16x1xi32, #tpu.memory_space<vmem>>, vector<16x1xi32>
    %c0_3 = arith.constant 0 : index
    %c0_4 = arith.constant 0 : index
    %2 = vector.load %arg2[%c0_3, %c0_4] : memref<64x32xbf16, #tpu.memory_space<vmem>>, vector<64x32xbf16>
    %c0_5 = arith.constant 0 : index
    %c0_6 = arith.constant 0 : index
    %3 = vector.load %arg3[%c0_5, %c0_6] : memref<16x32xbf16, #tpu.memory_space<vmem>>, vector<16x32xbf16>
    %c0_7 = arith.constant 0 : index
    %c0_8 = arith.constant 0 : index
    %4 = vector.load %arg4[%c0_7, %c0_8] : memref<32x64xbf16, #tpu.memory_space<vmem>>, vector<32x64xbf16>
    %c0_9 = arith.constant 0 : index
    %c0_10 = arith.constant 0 : index
    %5 = vector.load %arg5[%c0_9, %c0_10] : memref<1x64xf32, #tpu.memory_space<vmem>>, vector<1x64xf32>
    %c0_11 = arith.constant 0 : index
    %c0_12 = arith.constant 0 : index
    %6 = vector.load %arg6[%c0_11, %c0_12] : memref<64x64xbf16, #tpu.memory_space<vmem>>, vector<64x64xbf16>
    %c0_13 = arith.constant 0 : index
    %c0_14 = arith.constant 0 : index
    %7 = vector.load %arg7[%c0_13, %c0_14] : memref<1x64xf32, #tpu.memory_space<vmem>>, vector<1x64xf32>
    %c0_15 = arith.constant 0 : index
    %c0_16 = arith.constant 0 : index
    %8 = vector.load %arg8[%c0_15, %c0_16] : memref<64x64xbf16, #tpu.memory_space<vmem>>, vector<64x64xbf16>
    %c0_17 = arith.constant 0 : index
    %c0_18 = arith.constant 0 : index
    %9 = vector.load %arg9[%c0_17, %c0_18] : memref<1x64xf32, #tpu.memory_space<vmem>>, vector<1x64xf32>
    %10 = tpu.iota {dimensions = array<i32: 1>} : vector<16x64xi32>
    %11 = vector.broadcast %0 : vector<16x1xi32> to vector<16x64xi32>
    %12 = arith.cmpi eq, %11, %10 : vector<16x64xi32>
    %cst = arith.constant 1.000000e+00 : f32
    %cst_19 = arith.constant 0.000000e+00 : f32
    %13 = vector.broadcast %cst : f32 to vector<16x64xf32>
    %14 = vector.broadcast %cst_19 : f32 to vector<16x64xf32>
    %15 = arith.select %12, %13, %14 : vector<16x64xi1>, vector<16x64xf32>
    %16 = arith.truncf %15 : vector<16x64xf32> to vector<16x64xbf16>
    %cst_20 = arith.constant dense<0.000000e+00> : vector<16x32xf32>
    %17 = tpu.matmul %16, %2, %cst_20 {dimension_numbers = #tpu.dot_dimension_numbers<[1], [0], [0], [1], [0, 0, 1, 1], [], []>} : vector<16x64xbf16>, vector<64x32xbf16>, vector<16x32xf32> -> vector<16x32xf32>
    %18 = tpu.iota {dimensions = array<i32: 1>} : vector<16x16xi32>
    %19 = vector.broadcast %1 : vector<16x1xi32> to vector<16x16xi32>
    %20 = arith.cmpi eq, %19, %18 : vector<16x16xi32>
    %cst_21 = arith.constant 1.000000e+00 : f32
    %cst_22 = arith.constant 0.000000e+00 : f32
    %21 = vector.broadcast %cst_21 : f32 to vector<16x16xf32>
    %22 = vector.broadcast %cst_22 : f32 to vector<16x16xf32>
    %23 = arith.select %20, %21, %22 : vector<16x16xi1>, vector<16x16xf32>
    %24 = arith.truncf %23 : vector<16x16xf32> to vector<16x16xbf16>
    %cst_23 = arith.constant dense<0.000000e+00> : vector<16x32xf32>
    %25 = tpu.matmul %24, %3, %cst_23 {dimension_numbers = #tpu.dot_dimension_numbers<[1], [0], [0], [1], [0, 0, 1, 1], [], []>} : vector<16x16xbf16>, vector<16x32xbf16>, vector<16x32xf32> -> vector<16x32xf32>
    %26 = arith.addf %17, %25 : vector<16x32xf32>
    %27 = arith.truncf %26 : vector<16x32xf32> to vector<16x32xbf16>
    %cst_24 = arith.constant dense<0.000000e+00> : vector<16x64xf32>
    %28 = tpu.matmul %27, %4, %cst_24 {dimension_numbers = #tpu.dot_dimension_numbers<[1], [0], [0], [1], [0, 0, 1, 1], [], []>} : vector<16x32xbf16>, vector<32x64xbf16>, vector<16x64xf32> -> vector<16x64xf32>
    %29 = vector.broadcast %5 : vector<1x64xf32> to vector<16x64xf32>
    %30 = arith.addf %28, %29 : vector<16x64xf32>
    %31 = arith.mulf %30, %30 : vector<16x64xf32>
    %32 = arith.mulf %30, %31 : vector<16x64xf32>
    %cst_25 = arith.constant 4.471500e-02 : f32
    %33 = vector.broadcast %cst_25 : f32 to vector<16x64xf32>
    %34 = arith.mulf %33, %32 : vector<16x64xf32>
    %35 = arith.addf %30, %34 : vector<16x64xf32>
    %cst_26 = arith.constant 0.797884583 : f32
    %36 = vector.broadcast %cst_26 : f32 to vector<16x64xf32>
    %37 = arith.mulf %36, %35 : vector<16x64xf32>
    %38 = math.tanh %37 : vector<16x64xf32>
    %cst_27 = arith.constant 1.000000e+00 : f32
    %39 = vector.broadcast %cst_27 : f32 to vector<16x64xf32>
    %40 = arith.addf %39, %38 : vector<16x64xf32>
    %cst_28 = arith.constant 5.000000e-01 : f32
    %41 = vector.broadcast %cst_28 : f32 to vector<16x64xf32>
    %42 = arith.mulf %41, %40 : vector<16x64xf32>
    %43 = arith.mulf %30, %42 : vector<16x64xf32>
    %44 = arith.truncf %43 : vector<16x64xf32> to vector<16x64xbf16>
    %cst_29 = arith.constant dense<0.000000e+00> : vector<16x64xf32>
    %45 = tpu.matmul %44, %6, %cst_29 {dimension_numbers = #tpu.dot_dimension_numbers<[1], [0], [0], [1], [0, 0, 1, 1], [], []>} : vector<16x64xbf16>, vector<64x64xbf16>, vector<16x64xf32> -> vector<16x64xf32>
    %46 = vector.broadcast %7 : vector<1x64xf32> to vector<16x64xf32>
    %47 = arith.addf %45, %46 : vector<16x64xf32>
    %48 = arith.mulf %47, %47 : vector<16x64xf32>
    %49 = arith.mulf %47, %48 : vector<16x64xf32>
    %cst_30 = arith.constant 4.471500e-02 : f32
    %50 = vector.broadcast %cst_30 : f32 to vector<16x64xf32>
    %51 = arith.mulf %50, %49 : vector<16x64xf32>
    %52 = arith.addf %47, %51 : vector<16x64xf32>
    %cst_31 = arith.constant 0.797884583 : f32
    %53 = vector.broadcast %cst_31 : f32 to vector<16x64xf32>
    %54 = arith.mulf %53, %52 : vector<16x64xf32>
    %55 = math.tanh %54 : vector<16x64xf32>
    %cst_32 = arith.constant 1.000000e+00 : f32
    %56 = vector.broadcast %cst_32 : f32 to vector<16x64xf32>
    %57 = arith.addf %56, %55 : vector<16x64xf32>
    %cst_33 = arith.constant 5.000000e-01 : f32
    %58 = vector.broadcast %cst_33 : f32 to vector<16x64xf32>
    %59 = arith.mulf %58, %57 : vector<16x64xf32>
    %60 = arith.mulf %47, %59 : vector<16x64xf32>
    %61 = arith.truncf %60 : vector<16x64xf32> to vector<16x64xbf16>
    %cst_34 = arith.constant dense<0.000000e+00> : vector<16x64xf32>
    %62 = tpu.matmul %61, %8, %cst_34 {dimension_numbers = #tpu.dot_dimension_numbers<[1], [0], [0], [1], [0, 0, 1, 1], [], []>} : vector<16x64xbf16>, vector<64x64xbf16>, vector<16x64xf32> -> vector<16x64xf32>
    %63 = vector.broadcast %9 : vector<1x64xf32> to vector<16x64xf32>
    %64 = arith.addf %62, %63 : vector<16x64xf32>
    %c0_35 = arith.constant 0 : index
    %c0_36 = arith.constant 0 : index
    %65 = vector.load %arg10[%c0_35, %c0_36] : memref<16x64xf32, #tpu.memory_space<vmem>>, vector<16x64xf32>
    tpu.vector_store %arg10[%c0_35, %c0_36], %64 {strides = array<i32>} : memref<16x64xf32, #tpu.memory_space<vmem>>, vector<16x64xf32>,
    return
  }
}

</mosaic_0001>

<llo_original>
// kernel: model_for_masked_lm_forward.1
$region0: #{model_for_masked_lm_forward.1}
  #allocation0 [shape = 'u32[]', space=smem, size = 0x4, offset = 0x4, fixed_abs, tag = 'smem constant byte address 0x4 - core index']
  #allocation1 [shape = 'u32[144,128]{1,0:T(1,128)}', space=vmem, size = 0x12000, scoped, tag = 'internal scratch']
  %s0 = inlined_call_operand.vmem [shape: s32[16,1], index: 0, kind: input, shape index: {}]
  %s1 = inlined_call_operand.vmem [shape: s32[16,1], index: 1, kind: input, shape index: {}]
  %s2 = inlined_call_operand.hbm [shape: bf16[64,32], index: 2, kind: input, shape index: {}]
  %s3 = inlined_call_operand.hbm [shape: bf16[16,32], index: 3, kind: input, shape index: {}]
  %s4 = inlined_call_operand.vmem [shape: bf16[32,64], index: 4, kind: input, shape index: {}]
  %s5 = inlined_call_operand.hbm [shape: f32[1,64], index: 5, kind: input, shape index: {}]
  %s6 = inlined_call_operand.vmem [shape: bf16[64,64], index: 6, kind: input, shape index: {}]
  %s7 = inlined_call_operand.hbm [shape: f32[1,64], index: 7, kind: input, shape index: {}]
  %s8 = inlined_call_operand.vmem [shape: bf16[64,64], index: 8, kind: input, shape index: {}]
  %s9 = inlined_call_operand.vmem [shape: f32[1,64], index: 9, kind: input, shape index: {}]
  %s10 = inlined_call_operand.hbm [shape: f32[16,64], index: 10, kind: output, shape index: {}]
  %s11 = sld [smem:[#allocation0]]
  $region66: #{model_for_masked_lm_forward.1} parent=0
    _
  %s13 = ssub.s32 1, %s11
  %s14 = scalar_select 0, %s13, %s11
  $region1: #{model_for_masked_lm_forward.1} parent=0
    #allocation2 [shape = 'u8[16384]{0}', space=vmem, size = 0x4000, scoped, tag = 'input window, operand 2, single buffered']
    #allocation3 [shape = 's32[1]{0}', space=sflag, size = 0x4, scoped, tag = 'scoped memory for model_for_masked_lm_forward.1']
    #allocation4 [shape = 's32[1]{0}', space=sflag, size = 0x4, scoped, tag = 'scoped memory for model_for_masked_lm_forward.1']
    #allocation5 [shape = 'u8[4096]{0}', space=vmem, size = 0x1000, scoped, tag = 'input window, operand 3, single buffered']
    #allocation6 [shape = 's32[1]{0}', space=sflag, size = 0x4, scoped, tag = 'scoped memory for model_for_masked_lm_forward.1']
    #allocation7 [shape = 'u8[512]{0}', space=vmem, size = 0x400, scoped, tag = 'input window, operand 5, single buffered']
    #allocation8 [shape = 'u8[512]{0}', space=vmem, size = 0x400, scoped, tag = 'input window, operand 7, single buffered']
    #allocation9 [shape = 's32[1]{0}', space=sflag, size = 0x4, scoped, tag = 'scoped memory for model_for_masked_lm_forward.1']
    #allocation10 [shape = 'u8[8192]{0}', space=vmem, size = 0x2000, scoped, tag = 'output window, operand 0, single buffered']
    %15 = vsyncpa [#allocation3], 0
    %16 = vsyncpa [#allocation6], 0
    %17 = vsyncpa [#allocation9], 0
    %18 = vsyncpa [#allocation4], 0
    // Predicated region
    $region2: #{model_for_masked_lm_forward.1} parent=1 // pred_check
      _
    $region3: #{model_for_masked_lm_forward.1} parent=1 // pred_check_branch
      %20 = sbr.rel (0) target = $region5
    $region4: #{model_for_masked_lm_forward.1} parent=1 // pred_region
      _
    $region5: #{model_for_masked_lm_forward.1} parent=1 // pred_fallthru
      _
    // Predicated region
    $region6: #{model_for_masked_lm_forward.1} parent=1 // pred_check
      _
    $region7: #{model_for_masked_lm_forward.1} parent=1 // pred_check_branch
      %22 = sbr.rel (0) target = $region9
    $region8: #{model_for_masked_lm_forward.1} parent=1 // pred_region
      _
    $region9: #{model_for_masked_lm_forward.1} parent=1 // pred_fallthru
      _
    // Predicated region
    $region10: #{model_for_masked_lm_forward.1} parent=1 // pred_check
      _
    $region11: #{model_for_masked_lm_forward.1} parent=1 // pred_check_branch
      %24 = sbr.rel (0) target = $region13
    $region12: #{model_for_masked_lm_forward.1} parent=1 // pred_region
      %s26 = ssub.s32 512, 512
      %27 = vsyncadd [#allocation3], %s26
      %s28 = sshll.u32 [#allocation2], 4
      %s29 = int_to_ptr.vmem [resolvable:$true] %s28
      %34 = dma.hbm_to_vmem [thread:$0]  %s2, 512, %s29, [#allocation3], 64, 64, 4
    $region13: #{model_for_masked_lm_forward.1} parent=1 // pred_fallthru
      _
    // Predicated region
    $region14: #{model_for_masked_lm_forward.1} parent=1 // pred_check
      _
    $region15: #{model_for_masked_lm_forward.1} parent=1 // pred_check_branch
      %36 = sbr.rel (0) target = $region17
    $region16: #{model_for_masked_lm_forward.1} parent=1 // pred_region
      %s38 = ssub.s32 128, 128
      %39 = vsyncadd [#allocation6], %s38
      %s40 = sshll.u32 [#allocation5], 4
      %s41 = int_to_ptr.vmem [resolvable:$true] %s40
      %46 = dma.hbm_to_vmem [thread:$0]  %s3, 128, %s41, [#allocation6], 64, 64, 4
    $region17: #{model_for_masked_lm_forward.1} parent=1 // pred_fallthru
      _
    // Predicated region
    $region18: #{model_for_masked_lm_forward.1} parent=1 // pred_check
      _
    $region19: #{model_for_masked_lm_forward.1} parent=1 // pred_check_branch
      %48 = sbr.rel (0) target = $region21
    $region20: #{model_for_masked_lm_forward.1} parent=1 // pred_region
      _
    $region21: #{model_for_masked_lm_forward.1} parent=1 // pred_fallthru
      _
    // Predicated region
    $region22: #{model_for_masked_lm_forward.1} parent=1 // pred_check
      _
    $region23: #{model_for_masked_lm_forward.1} parent=1 // pred_check_branch
      %50 = sbr.rel (0) target = $region25
    $region24: #{model_for_masked_lm_forward.1} parent=1 // pred_region
      %s52 = ssub.s32 16, 16
      %53 = vsyncadd [#allocation6], %s52
      %s55 = sshll.u32 [#allocation7], 4
      %s56 = int_to_ptr.vmem [resolvable:$true] %s55
      %58 = dma.hbm_to_vmem [thread:$0]  %s5, 16, %s56, [#allocation6]
    $region25: #{model_for_masked_lm_forward.1} parent=1 // pred_fallthru
      _
    // Predicated region
    $region26: #{model_for_masked_lm_forward.1} parent=1 // pred_check
      _
    $region27: #{model_for_masked_lm_forward.1} parent=1 // pred_check_branch
      %60 = sbr.rel (0) target = $region29
    $region28: #{model_for_masked_lm_forward.1} parent=1 // pred_region
      _
    $region29: #{model_for_masked_lm_forward.1} parent=1 // pred_fallthru
      _
    // Predicated region
    $region30: #{model_for_masked_lm_forward.1} parent=1 // pred_check
      _
    $region31: #{model_for_masked_lm_forward.1} parent=1 // pred_check_branch
      %62 = sbr.rel (0) target = $region33
    $region32: #{model_for_masked_lm_forward.1} parent=1 // pred_region
      %s64 = ssub.s32 16, 16
      %65 = vsyncadd [#allocation9], %s64
      %s67 = sshll.u32 [#allocation8], 4
      %s68 = int_to_ptr.vmem [resolvable:$true] %s67
      %70 = dma.hbm_to_vmem [thread:$0]  %s7, 16, %s68, [#allocation9]
    $region33: #{model_for_masked_lm_forward.1} parent=1 // pred_fallthru
      _
    // Predicated region
    $region34: #{model_for_masked_lm_forward.1} parent=1 // pred_check
      _
    $region35: #{model_for_masked_lm_forward.1} parent=1 // pred_check_branch
      %72 = sbr.rel (0) target = $region37
    $region36: #{model_for_masked_lm_forward.1} parent=1 // pred_region
      _
    $region37: #{model_for_masked_lm_forward.1} parent=1 // pred_fallthru
      _
    // Predicated region
    $region38: #{model_for_masked_lm_forward.1} parent=1 // pred_check
      _
    $region39: #{model_for_masked_lm_forward.1} parent=1 // pred_check_branch
      %74 = sbr.rel (0) target = $region41
    $region40: #{model_for_masked_lm_forward.1} parent=1 // pred_region
      _
    $region41: #{model_for_masked_lm_forward.1} parent=1 // pred_fallthru
      _
    // Predicated region
    $region42: #{model_for_masked_lm_forward.1} parent=1 // pred_check
      _
    $region43: #{model_for_masked_lm_forward.1} parent=1 // pred_check_branch
      %76 = sbr.rel (0) target = $region45
    $region44: #{model_for_masked_lm_forward.1} parent=1 // pred_region
      %77 = dma.done [#allocation3], 512
    $region45: #{model_for_masked_lm_forward.1} parent=1 // pred_fallthru
      _
    // Predicated region
    $region46: #{model_for_masked_lm_forward.1} parent=1 // pred_check
      _
    $region47: #{model_for_masked_lm_forward.1} parent=1 // pred_check_branch
      %79 = sbr.rel (0) target = $region49
    $region48: #{model_for_masked_lm_forward.1} parent=1 // pred_region
      %80 = dma.done [#allocation6], 128
    $region49: #{model_for_masked_lm_forward.1} parent=1 // pred_fallthru
      _
    // Predicated region
    $region50: #{model_for_masked_lm_forward.1} parent=1 // pred_check
      _
    $region51: #{model_for_masked_lm_forward.1} parent=1 // pred_check_branch
      %82 = sbr.rel (0) target = $region53
    $region52: #{model_for_masked_lm_forward.1} parent=1 // pred_region
      %83 = dma.done [#allocation6], 16
    $region53: #{model_for_masked_lm_forward.1} parent=1 // pred_fallthru
      _
    // Predicated region
    $region54: #{model_for_masked_lm_forward.1} parent=1 // pred_check
      _
    $region55: #{model_for_masked_lm_forward.1} parent=1 // pred_check_branch
      %85 = sbr.rel (0) target = $region57
    $region56: #{model_for_masked_lm_forward.1} parent=1 // pred_region
      %86 = dma.done [#allocation9], 16
    $region57: #{model_for_masked_lm_forward.1} parent=1 // pred_fallthru
      _
    %v88 = vld [vmem:[%s0] sm:$0xff]
    %v89 = vld [vmem:[%s0 + $0x8] sm:$0xff]
    %v90 = vld [vmem:[%s1] sm:$0xff]
    %v91 = vld [vmem:[%s1 + $0x8] sm:$0xff]
    %v92 = vld [vmem:[#allocation2] sm:$0xf]
    %v93 = vld [vmem:[#allocation2 + $0x4] sm:$0xf]
    %v94 = vld [vmem:[#allocation2 + $0x8] sm:$0xf]
    %v95 = vld [vmem:[#allocation2 + $0xc] sm:$0xf]
    %v96 = vld [vmem:[#allocation2 + $0x10] sm:$0xf]
    %v97 = vld [vmem:[#allocation2 + $0x14] sm:$0xf]
    %v98 = vld [vmem:[#allocation2 + $0x18] sm:$0xf]
    %v99 = vld [vmem:[#allocation2 + $0x1c] sm:$0xf]
    %v100 = vld [vmem:[#allocation5] sm:$0xf]
    %v101 = vld [vmem:[#allocation5 + $0x4] sm:$0xf]
    %v102 = vld [vmem:[%s4] sm:$0xf]
    %v103 = vld [vmem:[%s4 + $0x4] sm:$0xf]
    %v104 = vld [vmem:[%s4 + $0x8] sm:$0xf]
    %v105 = vld [vmem:[%s4 + $0xc] sm:$0xf]
    %v106 = vld [vmem:[#allocation7] sm:$0x1]
    %v107 = vld [vmem:[%s6] sm:$0xf]
    %v108 = vld [vmem:[%s6 + $0x4] sm:$0xf]
    %v109 = vld [vmem:[%s6 + $0x8] sm:$0xf]
    %v110 = vld [vmem:[%s6 + $0xc] sm:$0xf]
    %v111 = vld [vmem:[%s6 + $0x10] sm:$0xf]
    %v112 = vld [vmem:[%s6 + $0x14] sm:$0xf]
    %v113 = vld [vmem:[%s6 + $0x18] sm:$0xf]
    %v114 = vld [vmem:[%s6 + $0x1c] sm:$0xf]
    %v115 = vld [vmem:[#allocation8] sm:$0x1]
    %v116 = vld [vmem:[%s8] sm:$0xf]
    %v117 = vld [vmem:[%s8 + $0x4] sm:$0xf]
    %v118 = vld [vmem:[%s8 + $0x8] sm:$0xf]
    %v119 = vld [vmem:[%s8 + $0xc] sm:$0xf]
    %v120 = vld [vmem:[%s8 + $0x10] sm:$0xf]
    %v121 = vld [vmem:[%s8 + $0x14] sm:$0xf]
    %v122 = vld [vmem:[%s8 + $0x18] sm:$0xf]
    %v123 = vld [vmem:[%s8 + $0x1c] sm:$0xf]
    %v124 = vld [vmem:[%s9] sm:$0x1]
    %v125 = vlaneseq
    %v126 = vand.u32 %v125, 127
    %127 = vset.pattern.permute.xlu0 0
    %128 = vperm.xlu0 %127, %v88
    %v129 = vpop.permute.xlu0 %128
    %130 = vset.pattern.permute.xlu0 0
    %131 = vperm.xlu0 %130, %v89
    %v132 = vpop.permute.xlu0 %131
    %vm133 = vcmp.eq.s32.totalorder %v129, %v126
    %vm134 = vcmp.eq.s32.totalorder %v132, %v126
    %v135 = vsel %vm133, 1.0, 0.0
    %v136 = vsel %vm134, 1.0, 0.0
    %v137 = vpack.c.bf16 %v136, %v135
    %138 = vset.pattern.permute.xlu0 0
    %139 = vperm.xlu0 %138, %v90
    %v140 = vpop.permute.xlu0 %139
    %141 = vset.pattern.permute.xlu0 0
    %142 = vperm.xlu0 %141, %v91
    %v143 = vpop.permute.xlu0 %142
    %vm144 = vcmp.eq.s32.totalorder %v140, %v126
    %vm145 = vcmp.eq.s32.totalorder %v143, %v126
    %v146 = vsel %vm144, 1.0, 0.0
    %v147 = vsel %vm145, 1.0, 0.0
    %v148 = vpack.c.bf16 %v147, %v146
    %v151 = vunpack.c.l.b16 %v100
    %v152 = vunpack.c.l.b16 %v101
    %v153 = vpack.c.b16 %v152, %v151
    %vm155 = vcmask 130048
    %v157 = vsel %vm155, %v148, 0
    %159 = vmatprep.subr.bf16.mxu0 0
    %160 = vmatpush1.bf16.msra.mxu0 %v153
    %161 = vmatprep.subr.bf16.mxu0 0
    %162 = vmatpush1.bf16.msra.mxu0 0
    %163 = vmatprep.subr.bf16.mxu0 0
    %164 = vmatpush1.bf16.msra.mxu0 0
    %165 = vmatprep.subr.bf16.mxu0 0
    %166 = vmatpush1.bf16.msra.mxu0 0
    %167 = vmatprep.subr.bf16.mxu0 0
    %168 = vmatpush1.bf16.msra.mxu0 0
    %169 = vmatprep.subr.bf16.mxu0 0
    %170 = vmatpush1.bf16.msra.mxu0 0
    %171 = vmatprep.subr.bf16.mxu0 0
    %172 = vmatpush1.bf16.msra.mxu0 0
    %173 = vmatprep.subr.bf16.mxu0 0
    %174 = vmatpush1.bf16.msra.mxu0 0
    %175 = vmatprep.subr.bf16.mxu0 0
    %176 = vmatpush1.bf16.msra.mxu0 0
    %177 = vmatprep.subr.bf16.mxu0 0
    %178 = vmatpush1.bf16.msra.mxu0 0
    %179 = vmatprep.subr.bf16.mxu0 0
    %180 = vmatpush1.bf16.msra.mxu0 0
    %181 = vmatprep.subr.bf16.mxu0 0
    %182 = vmatpush1.bf16.msra.mxu0 0
    %183 = vmatprep.subr.bf16.mxu0 0
    %184 = vmatpush1.bf16.msra.mxu0 0
    %185 = vmatprep.subr.bf16.mxu0 0
    %186 = vmatpush1.bf16.msra.mxu0 0
    %187 = vmatprep.subr.bf16.mxu0 0
    %188 = vmatpush1.bf16.msra.mxu0 0
    %189 = vmatprep.subr.bf16.mxu0 0
    %190 = vmatpush1.bf16.msra.mxu0 0
    %191 = vmatprep.mubr.bf16.mxu0 0
    %192 = vmatmul.mubr.bf16.gmra.mrb[0].mxu0 %v157
    %v193 = vpop.f32.mrb[0].mxu0
    %v194 = vadd.f32 0.0, %v193
    %v195 = vpop.f32.mrb[0].mxu0
    %v196 = vpop.f32.mrb[0].mxu0
    %v197 = vadd.f32 0.0, %v196
    %v198 = vpop.f32.mrb[0].mxu0
    %199 = vdwg.mxu0
    %v208 = vunpack.c.l.b16 %v92
    %v209 = vunpack.c.l.b16 %v93
    %v210 = vunpack.c.l.b16 %v94
    %v211 = vunpack.c.l.b16 %v95
    %v212 = vunpack.c.l.b16 %v96
    %v213 = vunpack.c.l.b16 %v97
    %v214 = vunpack.c.l.b16 %v98
    %v215 = vunpack.c.l.b16 %v99
    %v216 = vpack.c.b16 %v209, %v208
    %v217 = vpack.c.b16 %v211, %v210
    %v218 = vpack.c.b16 %v213, %v212
    %v219 = vpack.c.b16 %v215, %v214
    %vm224 = vcmask 523264
    %v226 = vsel %vm224, %v137, 0
    %228 = vmatprep.subr.bf16.mxu0 0
    %229 = vmatpush1.bf16.msra.mxu0 %v216
    %230 = vmatprep.subr.bf16.mxu0 0
    %231 = vmatpush1.bf16.msra.mxu0 %v217
    %232 = vmatprep.subr.bf16.mxu0 0
    %233 = vmatpush1.bf16.msra.mxu0 %v218
    %234 = vmatprep.subr.bf16.mxu0 0
    %235 = vmatpush1.bf16.msra.mxu0 %v219
    %236 = vmatprep.subr.bf16.mxu0 0
    %237 = vmatpush1.bf16.msra.mxu0 0
    %238 = vmatprep.subr.bf16.mxu0 0
    %239 = vmatpush1.bf16.msra.mxu0 0
    %240 = vmatprep.subr.bf16.mxu0 0
    %241 = vmatpush1.bf16.msra.mxu0 0
    %242 = vmatprep.subr.bf16.mxu0 0
    %243 = vmatpush1.bf16.msra.mxu0 0
    %244 = vmatprep.subr.bf16.mxu0 0
    %245 = vmatpush1.bf16.msra.mxu0 0
    %246 = vmatprep.subr.bf16.mxu0 0
    %247 = vmatpush1.bf16.msra.mxu0 0
    %248 = vmatprep.subr.bf16.mxu0 0
    %249 = vmatpush1.bf16.msra.mxu0 0
    %250 = vmatprep.subr.bf16.mxu0 0
    %251 = vmatpush1.bf16.msra.mxu0 0
    %252 = vmatprep.subr.bf16.mxu0 0
    %253 = vmatpush1.bf16.msra.mxu0 0
    %254 = vmatprep.subr.bf16.mxu0 0
    %255 = vmatpush1.bf16.msra.mxu0 0
    %256 = vmatprep.subr.bf16.mxu0 0
    %257 = vmatpush1.bf16.msra.mxu0 0
    %258 = vmatprep.subr.bf16.mxu0 0
    %259 = vmatpush1.bf16.msra.mxu0 0
    %260 = vmatprep.mubr.bf16.mxu0 0
    %261 = vmatmul.mubr.bf16.gmra.mrb[0].mxu0 %v226
    %v262 = vpop.f32.mrb[0].mxu0
    %v263 = vadd.f32 %v194, %v262
    %v264 = vpop.f32.mrb[0].mxu0
    %v265 = vpop.f32.mrb[0].mxu0
    %v266 = vadd.f32 %v197, %v265
    %v267 = vpop.f32.mrb[0].mxu0
    %268 = vdwg.mxu0
    %v269 = vpack.c.bf16 %v266, %v263
    %v271 = vlaneseq
    %v272 = vshrl.u32 %v271, 7
    %v273 = vsub.s32 0, %v272
    %v274 = vrot.slane %v106, %v273
    %v280 = vunpack.c.l.b16 %v102
    %v281 = vunpack.c.l.b16 %v103
    %v282 = vunpack.c.l.b16 %v104
    %v283 = vunpack.c.l.b16 %v105
    %v284 = vpack.c.b16 %v281, %v280
    %v285 = vpack.c.b16 %v283, %v282
    %vm288 = vcmask 261120
    %v290 = vsel %vm288, %v269, 0
    %292 = vmatprep.subr.bf16.mxu0 0
    %293 = vmatpush1.bf16.msra.mxu0 %v284
    %294 = vmatprep.subr.bf16.mxu0 0
    %295 = vmatpush1.bf16.msra.mxu0 %v285
    %296 = vmatprep.subr.bf16.mxu0 0
    %297 = vmatpush1.bf16.msra.mxu0 0
    %298 = vmatprep.subr.bf16.mxu0 0
    %299 = vmatpush1.bf16.msra.mxu0 0
    %300 = vmatprep.subr.bf16.mxu0 0
    %301 = vmatpush1.bf16.msra.mxu0 0
    %302 = vmatprep.subr.bf16.mxu0 0
    %303 = vmatpush1.bf16.msra.mxu0 0
    %304 = vmatprep.subr.bf16.mxu0 0
    %305 = vmatpush1.bf16.msra.mxu0 0
    %306 = vmatprep.subr.bf16.mxu0 0
    %307 = vmatpush1.bf16.msra.mxu0 0
    %308 = vmatprep.subr.bf16.mxu0 0
    %309 = vmatpush1.bf16.msra.mxu0 0
    %310 = vmatprep.subr.bf16.mxu0 0
    %311 = vmatpush1.bf16.msra.mxu0 0
    %312 = vmatprep.subr.bf16.mxu0 0
    %313 = vmatpush1.bf16.msra.mxu0 0
    %314 = vmatprep.subr.bf16.mxu0 0
    %315 = vmatpush1.bf16.msra.mxu0 0
    %316 = vmatprep.subr.bf16.mxu0 0
    %317 = vmatpush1.bf16.msra.mxu0 0
    %318 = vmatprep.subr.bf16.mxu0 0
    %319 = vmatpush1.bf16.msra.mxu0 0
    %320 = vmatprep.subr.bf16.mxu0 0
    %321 = vmatpush1.bf16.msra.mxu0 0
    %322 = vmatprep.subr.bf16.mxu0 0
    %323 = vmatpush1.bf16.msra.mxu0 0
    %324 = vmatprep.mubr.bf16.mxu0 0
    %325 = vmatmul.mubr.bf16.gmra.mrb[0].mxu0 %v290
    %v326 = vpop.f32.mrb[0].mxu0
    %v327 = vadd.f32 %v274, %v326
    %v328 = vpop.f32.mrb[0].mxu0
    %v329 = vpop.f32.mrb[0].mxu0
    %v330 = vadd.f32 %v274, %v329
    %v331 = vpop.f32.mrb[0].mxu0
    %332 = vdwg.mxu0
    %v333 = vmul.f32 %v327, %v327
    %v334 = vmul.f32 %v330, %v330
    %v335 = vmul.f32 %v327, %v333
    %v336 = vmul.f32 %v330, %v334
    %v337 = vmul.f32 %v335, 0.044715
    %v338 = vmul.f32 %v336, 0.044715
    %v339 = vadd.f32 %v327, %v337
    %v340 = vadd.f32 %v330, %v338
    %v341 = vmul.f32 %v339, 0.7978846
    %v342 = vmul.f32 %v340, 0.7978846
    %v343 = vtanh.pop %v341
    %v344 = vtanh.pop %v342
    %v345 = vadd.f32 %v343, 1.0
    %v346 = vadd.f32 %v344, 1.0
    %v347 = vmul.f32 %v345, 0.5
    %v348 = vmul.f32 %v346, 0.5
    %v349 = vmul.f32 %v327, %v347
    %v350 = vmul.f32 %v330, %v348
    %v351 = vpack.c.bf16 %v350, %v349
    %v353 = vlaneseq
    %v354 = vshrl.u32 %v353, 7
    %v355 = vsub.s32 0, %v354
    %v356 = vrot.slane %v115, %v355
    %v366 = vunpack.c.l.b16 %v107
    %v367 = vunpack.c.l.b16 %v108
    %v368 = vunpack.c.l.b16 %v109
    %v369 = vunpack.c.l.b16 %v110
    %v370 = vunpack.c.l.b16 %v111
    %v371 = vunpack.c.l.b16 %v112
    %v372 = vunpack.c.l.b16 %v113
    %v373 = vunpack.c.l.b16 %v114
    %v374 = vpack.c.b16 %v367, %v366
    %v375 = vpack.c.b16 %v369, %v368
    %v376 = vpack.c.b16 %v371, %v370
    %v377 = vpack.c.b16 %v373, %v372
    %v383 = vsel %vm224, %v351, 0
    %385 = vmatprep.subr.bf16.mxu0 0
    %386 = vmatpush1.bf16.msra.mxu0 %v374
    %387 = vmatprep.subr.bf16.mxu0 0
    %388 = vmatpush1.bf16.msra.mxu0 %v375
    %389 = vmatprep.subr.bf16.mxu0 0
    %390 = vmatpush1.bf16.msra.mxu0 %v376
    %391 = vmatprep.subr.bf16.mxu0 0
    %392 = vmatpush1.bf16.msra.mxu0 %v377
    %393 = vmatprep.subr.bf16.mxu0 0
    %394 = vmatpush1.bf16.msra.mxu0 0
    %395 = vmatprep.subr.bf16.mxu0 0
    %396 = vmatpush1.bf16.msra.mxu0 0
    %397 = vmatprep.subr.bf16.mxu0 0
    %398 = vmatpush1.bf16.msra.mxu0 0
    %399 = vmatprep.subr.bf16.mxu0 0
    %400 = vmatpush1.bf16.msra.mxu0 0
    %401 = vmatprep.subr.bf16.mxu0 0
    %402 = vmatpush1.bf16.msra.mxu0 0
    %403 = vmatprep.subr.bf16.mxu0 0
    %404 = vmatpush1.bf16.msra.mxu0 0
    %405 = vmatprep.subr.bf16.mxu0 0
    %406 = vmatpush1.bf16.msra.mxu0 0
    %407 = vmatprep.subr.bf16.mxu0 0
    %408 = vmatpush1.bf16.msra.mxu0 0
    %409 = vmatprep.subr.bf16.mxu0 0
    %410 = vmatpush1.bf16.msra.mxu0 0
    %411 = vmatprep.subr.bf16.mxu0 0
    %412 = vmatpush1.bf16.msra.mxu0 0
    %413 = vmatprep.subr.bf16.mxu0 0
    %414 = vmatpush1.bf16.msra.mxu0 0
    %415 = vmatprep.subr.bf16.mxu0 0
    %416 = vmatpush1.bf16.msra.mxu0 0
    %417 = vmatprep.mubr.bf16.mxu0 0
    %418 = vmatmul.mubr.bf16.gmra.mrb[0].mxu0 %v383
    %v419 = vpop.f32.mrb[0].mxu0
    %v420 = vadd.f32 %v356, %v419
    %v421 = vpop.f32.mrb[0].mxu0
    %v422 = vpop.f32.mrb[0].mxu0
    %v423 = vadd.f32 %v356, %v422
    %v424 = vpop.f32.mrb[0].mxu0
    %425 = vdwg.mxu0
    %v426 = vmul.f32 %v420, %v420
    %v427 = vmul.f32 %v423, %v423
    %v428 = vmul.f32 %v420, %v426
    %v429 = vmul.f32 %v423, %v427
    %v430 = vmul.f32 %v428, 0.044715
    %v431 = vmul.f32 %v429, 0.044715
    %v432 = vadd.f32 %v420, %v430
    %v433 = vadd.f32 %v423, %v431
    %v434 = vmul.f32 %v432, 0.7978846
    %v435 = vmul.f32 %v433, 0.7978846
    %v436 = vtanh.pop %v434
    %v437 = vtanh.pop %v435
    %v438 = vadd.f32 %v436, 1.0
    %v439 = vadd.f32 %v437, 1.0
    %v440 = vmul.f32 %v438, 0.5
    %v441 = vmul.f32 %v439, 0.5
    %v442 = vmul.f32 %v420, %v440
    %v443 = vmul.f32 %v423, %v441
    %v444 = vpack.c.bf16 %v443, %v442
    %v446 = vlaneseq
    %v447 = vshrl.u32 %v446, 7
    %v448 = vsub.s32 0, %v447
    %v449 = vrot.slane %v124, %v448
    %v459 = vunpack.c.l.b16 %v116
    %v460 = vunpack.c.l.b16 %v117
    %v461 = vunpack.c.l.b16 %v118
    %v462 = vunpack.c.l.b16 %v119
    %v463 = vunpack.c.l.b16 %v120
    %v464 = vunpack.c.l.b16 %v121
    %v465 = vunpack.c.l.b16 %v122
    %v466 = vunpack.c.l.b16 %v123
    %v467 = vpack.c.b16 %v460, %v459
    %v468 = vpack.c.b16 %v462, %v461
    %v469 = vpack.c.b16 %v464, %v463
    %v470 = vpack.c.b16 %v466, %v465
    %v476 = vsel %vm224, %v444, 0
    %478 = vmatprep.subr.bf16.mxu0 0
    %479 = vmatpush1.bf16.msra.mxu0 %v467
    %480 = vmatprep.subr.bf16.mxu0 0
    %481 = vmatpush1.bf16.msra.mxu0 %v468
    %482 = vmatprep.subr.bf16.mxu0 0
    %483 = vmatpush1.bf16.msra.mxu0 %v469
    %484 = vmatprep.subr.bf16.mxu0 0
    %485 = vmatpush1.bf16.msra.mxu0 %v470
    %486 = vmatprep.subr.bf16.mxu0 0
    %487 = vmatpush1.bf16.msra.mxu0 0
    %488 = vmatprep.subr.bf16.mxu0 0
    %489 = vmatpush1.bf16.msra.mxu0 0
    %490 = vmatprep.subr.bf16.mxu0 0
    %491 = vmatpush1.bf16.msra.mxu0 0
    %492 = vmatprep.subr.bf16.mxu0 0
    %493 = vmatpush1.bf16.msra.mxu0 0
    %494 = vmatprep.subr.bf16.mxu0 0
    %495 = vmatpush1.bf16.msra.mxu0 0
    %496 = vmatprep.subr.bf16.mxu0 0
    %497 = vmatpush1.bf16.msra.mxu0 0
    %498 = vmatprep.subr.bf16.mxu0 0
    %499 = vmatpush1.bf16.msra.mxu0 0
    %500 = vmatprep.subr.bf16.mxu0 0
    %501 = vmatpush1.bf16.msra.mxu0 0
    %502 = vmatprep.subr.bf16.mxu0 0
    %503 = vmatpush1.bf16.msra.mxu0 0
    %504 = vmatprep.subr.bf16.mxu0 0
    %505 = vmatpush1.bf16.msra.mxu0 0
    %506 = vmatprep.subr.bf16.mxu0 0
    %507 = vmatpush1.bf16.msra.mxu0 0
    %508 = vmatprep.subr.bf16.mxu0 0
    %509 = vmatpush1.bf16.msra.mxu0 0
    %510 = vmatprep.mubr.bf16.mxu0 0
    %511 = vmatmul.mubr.bf16.gmra.mrb[0].mxu0 %v476
    %v512 = vpop.f32.mrb[0].mxu0
    %v513 = vadd.f32 %v449, %v512
    %v514 = vpop.f32.mrb[0].mxu0
    %v515 = vpop.f32.mrb[0].mxu0
    %v516 = vadd.f32 %v449, %v515
    %v517 = vpop.f32.mrb[0].mxu0
    %518 = vdwg.mxu0
    %519 = vst.msk [vmem:[#allocation10] sm:$0xff] %vm224, %v513
    %520 = vst.msk [vmem:[#allocation10 + $0x8] sm:$0xff] %vm224, %v516
    // Predicated region
    $region58: #{model_for_masked_lm_forward.1} parent=1 // pred_check
      _
    $region59: #{model_for_masked_lm_forward.1} parent=1 // pred_check_branch
      %522 = sbr.rel (0) target = $region61
    $region60: #{model_for_masked_lm_forward.1} parent=1 // pred_region
      %s524 = ssub.s32 256, 256
      %525 = vsyncadd [#allocation4], %s524
      %s526 = sshll.u32 [#allocation10], 4
      %s527 = int_to_ptr.vmem [resolvable:$true] %s526
      %532 = dma.vmem_to_hbm [thread:$0]  %s527, 256, %s10, [#allocation4], 128, 128, 8
    $region61: #{model_for_masked_lm_forward.1} parent=1 // pred_fallthru
      _
    // Predicated region
    $region62: #{model_for_masked_lm_forward.1} parent=1 // pred_check
      _
    $region63: #{model_for_masked_lm_forward.1} parent=1 // pred_check_branch
      %534 = sbr.rel (0) target = $region65
    $region64: #{model_for_masked_lm_forward.1} parent=1 // pred_region
      %535 = dma.done [#allocation4], 256
    $region65: #{model_for_masked_lm_forward.1} parent=1 // pred_fallthru
      _
    %536 = vsyncpa [#allocation3], 1
    %537 = vsyncpa [#allocation6], 1
    %538 = vsyncpa [#allocation9], 1
    %539 = vsyncpa [#allocation4], 1

</llo_original>
